<compile_context>
chip_gen: v6e
topology: v6e:2x2x1
jax: 0.10.0
libtpu: 0.0.40
codegen_flags: <defaults>
</compile_context>

<pallas_src>
import functools

import jax
import jax.numpy as jnp
from jax import lax
from jax.experimental import pallas as pl
from jax.experimental.pallas import tpu as pltpu

EPS = 1e-3  # matches DiceLoss eps = 0.001


def _combined_loss_kernel(x_ref, t_ref, w_ref,
                          soft_ref, inter_ref, present_ref, ce_ref,
                          *, p_orig, tile_p, tiles_per_part, need_mask):
    part = pl.program_id(0)   # "parallel" spatial partition (megacore on v7x)
    step = pl.program_id(1)   # "arbitrary" reduction over this partition's tiles

    @pl.when(step == 0)
    def _init():
        soft_ref[...] = jnp.zeros_like(soft_ref)
        inter_ref[...] = jnp.zeros_like(inter_ref)
        present_ref[...] = jnp.zeros_like(present_ref)
        ce_ref[...] = jnp.zeros_like(ce_ref)

    x = x_ref[...].astype(jnp.float32)          # (N, C, T) logits (bf16 ingest OK)
    t = t_ref[...].astype(jnp.int32)            # (N, T)    labels (int8 ingest OK)
    w = w_ref[...].astype(jnp.float32)          # (N, T)    per-pixel CE weights
    n, c, tp = x.shape

    # ---- per-pixel softmax statistics over the class axis (torch dim=1) ----
    m = jnp.max(x, axis=1, keepdims=True)               # (N, 1, T)
    ex = jnp.exp(x - m)
    s = jnp.sum(ex, axis=1, keepdims=True)               # (N, 1, T), >= 1
    # One EUP approximate reciprocal per pixel + one Newton step (~1e-7 rel
    # error), broadcast-multiplied across C on the VPU instead of C divides.
    inv_s = pl.reciprocal(s, approx=True)
    inv_s = inv_s * (2.0 - s * inv_s)

    # One-hot of the targets; reused for both the dice union and the CE gather.
    cls = lax.broadcasted_iota(jnp.int32, (n, c, tp), 1)
    onehot = (t[:, None, :] == cls).astype(jnp.float32)   # (N, C, T)
    # Union over the batch axis == what scatter_ leaves in encoded_target[0].
    present = jnp.max(onehot, axis=0)                      # (C, T)

    if need_mask:
        # Mask lanes past the true spatial extent (padded tail), folded into
        # the per-pixel terms: one (N,1,T), one (C,T) and one (N,T) multiply.
        base = (part * tiles_per_part + step) * tile_p
        lane = lax.broadcasted_iota(jnp.int32, (1, tp), 1)
        valid = ((lane + base) < p_orig).astype(jnp.float32)   # (1, T)
        inv_s = inv_s * valid[:, None, :]       # -> softmax is 0 on padded lanes
        present = present * valid
        w = w * valid

    soft = ex * inv_s                                      # softmax(x, dim=1)

    # ---- dice partial sums (no materialized `encoded` / `n_idx`) ----
    soft_ref[...] += jnp.sum(soft, axis=2)[None]                     # (1, N, C)
    inter_ref[...] += jnp.sum(soft[:1] * present, axis=-1)[None]     # (1, 1, C): batch 0 only
    present_ref[...] += jnp.sum(present[None, :, :], axis=-1)[None]  # (1, 1, C)

    # ---- weighted cross-entropy, lane-wise partial (no per-step reduce) ----
    x_at_t = jnp.sum(x * onehot, axis=1)                   # (N, T)
    ce_pix = (jnp.log(s) + m)[:, 0, :] - x_at_t            # -log_softmax @ target
    ce_ref[...] += (ce_pix * w)[None]                      # (1, N, T)


def _vmem_budget_bytes():
    """~75% of per-core VMEM (v5e/v6e 128 MiB, v7x 64 MiB), capped at 96 MiB."""
    cap = None
    try:
        cap = getattr(pltpu.get_tpu_info(), "vmem_capacity_bytes", None)
    except Exception:
        cap = None
    if not cap:
        cap = 64 << 20          # conservative fallback = v7x per-core physical VMEM
    return int(min((int(cap) * 3) // 4, 96 << 20))


def _choose_tile_p(p, n, c, x_isz, t_isz, w_isz, budget_bytes, target_steps=8):
    """Lane tile (multiple of 128) for the flattened spatial axis."""
    # VMEM bytes per lane of tile_p:
    #   double-buffered inputs (logits, targets, weights) + double-buffered CE
    #   partial-output block + ~6x f32 (N,C,T) temporaries Mosaic materializes
    #   (x upcast, x-m, exp, iota, onehot, x*onehot/soft) + (N,T)-ish rows.
    per_lane = (2 * n * c * x_isz            # logits, double-buffered
                + 2 * n * (t_isz + w_isz)    # targets + weights, double-buffered
                + 2 * n * 4                  # CE partial output block, double-buffered
                + 6 * n * c * 4              # f32 (N,C,T) temporaries
                + 8 * n * 4)                 # (N,T) rows (m, s, inv_s, w, ce, ...)
    max_tile = max(128, (budget_bytes // per_lane) // 128 * 128)
    # Aim for ~target_steps flat grid steps total: big enough to amortize the
    # ~0.35us/step pipeline overhead, small enough that DMA overlaps compute.
    want = -(-p // target_steps)
    want = -(-want // 128) * 128
    return int(min(max_tile, max(want, 128)))


def combined_loss(inputx, target, weight, weight_dice=1.0, weight_ce=1.0):
    """inputx: (N,C,H,W) float (f32/bf16), target: (N,H,W) int, weight: (N,H,W) float."""
    N, C, H, W = inputx.shape
    P = H * W

    x = inputx.reshape(N, C, P)                    # keep dtype: bf16 ingest halves HBM bytes
    t_dtype = jnp.int8 if C <= 127 else jnp.int32  # int8 labels: exact, 4x fewer bytes
    t = target.reshape(N, P).astype(t_dtype)
    w = weight.reshape(N, P)                       # keep native dtype; upcast in kernel

    budget = _vmem_budget_bytes()
    tile_p = _choose_tile_p(P, N, C,
                            jnp.dtype(x.dtype).itemsize,
                            jnp.dtype(t.dtype).itemsize,
                            jnp.dtype(w.dtype).itemsize,
                            budget)
    flat_tiles = pl.cdiv(P, tile_p)
    num_parts = 2 if flat_tiles >= 2 else 1        # both v7x TCs; harmless on v5e/v6e
    tiles_per_part = pl.cdiv(flat_tiles, num_parts)
    p_pad = num_parts * tiles_per_part * tile_p

    if p_pad != P:
        pad = p_pad - P
        x = jnp.pad(x, ((0, 0), (0, 0), (0, pad)))
        t = jnp.pad(t, ((0, 0), (0, pad)))
        w = jnp.pad(w, ((0, 0), (0, pad)))

    kernel = functools.partial(
        _combined_loss_kernel,
        p_orig=P, tile_p=tile_p, tiles_per_part=tiles_per_part,
        need_mask=(p_pad != P))

    cost = pl.CostEstimate(
        flops=int(16 * N * C * p_pad + 12 * N * p_pad),
        transcendentals=int(N * C * p_pad + 2 * N * p_pad),
        bytes_accessed=int(N * C * p_pad * x.dtype.itemsize
                           + N * p_pad * (t.dtype.itemsize + w.dtype.itemsize)
                           + num_parts * (N * C + 2 * C + N * tile_p) * 4),
    )

    part_soft, part_inter, part_present, part_ce = pl.pallas_call(
        kernel,
        out_shape=(
            jax.ShapeDtypeStruct((num_parts, N, C), jnp.float32),       # softmax mass
            jax.ShapeDtypeStruct((num_parts, 1, C), jnp.float32),       # batch-0 intersection
            jax.ShapeDtypeStruct((num_parts, 1, C), jnp.float32),       # one-hot union mass
            jax.ShapeDtypeStruct((num_parts, N, tile_p), jnp.float32),  # lane-wise weighted CE
        ),
        grid=(num_parts, tiles_per_part),
        in_specs=[
            pl.BlockSpec((N, C, tile_p), lambda p, i: (0, 0, p * tiles_per_part + i)),
            pl.BlockSpec((N, tile_p), lambda p, i: (0, p * tiles_per_part + i)),
            pl.BlockSpec((N, tile_p), lambda p, i: (0, p * tiles_per_part + i)),
        ],
        out_specs=(
            pl.BlockSpec((1, N, C), lambda p, i: (p, 0, 0)),
            pl.BlockSpec((1, 1, C), lambda p, i: (p, 0, 0)),
            pl.BlockSpec((1, 1, C), lambda p, i: (p, 0, 0)),
            pl.BlockSpec((1, N, tile_p), lambda p, i: (p, 0, 0)),
        ),
        compiler_params=pltpu.CompilerParams(
            dimension_semantics=("parallel", "arbitrary"),
            vmem_limit_bytes=int(budget),
        ),
        cost_estimate=cost,
    )(x, t, w)

    # ---- tiny pure-JAX epilogue: combine the per-partition partials ----
    soft_sum = jnp.sum(part_soft, axis=0)                   # (N, C) softmax mass
    inter0 = jnp.sum(part_inter, axis=0)[0]                 # (C,)   batch-0 intersection
    pres = jnp.sum(part_present, axis=0)[0]                 # (C,)   one-hot union mass
    # scatter_(1, target, 1) only ever writes batch element 0 of encoded_target.
    inter = jnp.zeros((N, C), jnp.float32).at[0].set(inter0)
    denom = soft_sum + jnp.zeros((N, C), jnp.float32).at[0].set(pres) + EPS
    lpc = 1.0 - 2.0 * inter / denom                          # (N, C)
    dice_val = jnp.sum(lpc) / C                              # .sum(0).sum() / C
    ce_val = jnp.sum(part_ce) / (N * P)                      # torch.mean(ce * weight)
    total = dice_val * weight_dice + ce_val * weight_ce
    return total, dice_val, ce_val


def reference(inputx, target, weight, weight_dice=1.0, weight_ce=1.0):
    """Pure-JAX mirror of the PyTorch forward (training path)."""
    N, C, H, W = inputx.shape
    x = inputx.astype(jnp.float32)
    soft = jax.nn.softmax(x, axis=1)
    logsm = jax.nn.log_softmax(x, axis=1)
    onehot = jax.nn.one_hot(target, C, axis=1, dtype=jnp.float32)  # (N,C,H,W)
    present = jnp.max(onehot, axis=0)                              # (C,H,W)
    encoded = jnp.zeros_like(soft).at[0].set(present)
    inter = jnp.sum(soft * encoded, axis=(2, 3))
    denom = jnp.sum(soft + encoded, axis=(2, 3)) + EPS
    lpc = 1.0 - 2.0 * inter / denom
    dice = jnp.sum(lpc) / C
    ce_pix = -jnp.take_along_axis(logsm, target[:, None], axis=1)[:, 0]
    ce = jnp.mean(ce_pix * weight)
    total = dice * weight_dice + ce * weight_ce
    return total, dice, ce


if __name__ == "__main__":
    key = jax.random.PRNGKey(0)
    keys = jax.random.split(key, 6)

    def _check(shape, wd, wc, ks):
        N, C, H, W = shape
        k1, k2, k3 = ks
        inputx = jax.random.normal(k1, (N, C, H, W), jnp.float32)
        target = jax.random.randint(k2, (N, H, W), 0, C, jnp.int32)
        weight = jax.random.uniform(k3, (N, H, W), jnp.float32)
        out = combined_loss(inputx, target, weight, wd, wc)
        jax.block_until_ready(out)
        ref = reference(inputx, target, weight, wd, wc)
        for got, exp in zip(out, ref):
            assert jnp.allclose(got, exp, rtol=1e-4, atol=1e-4), (got, exp)

    # 1) the module's nominal small shape: two partitions, one tile each, no mask
    _check((2, 4, 16, 16), 1.0, 1.0, keys[0:3])
    # 2) multi-tile accumulation per partition + masked padded tail + non-default weights
    _check((2, 4, 50, 50), 0.7, 1.3, keys[3:6])

    print("KERNEL_OK")
</pallas_src>

<mosaic_0001>
module attributes {stable_mosaic.version = 11 : i64} {
  func.func @_combined_loss_kernel(%arg0: i32, %arg1: i32, %arg2: memref<2x4x128xf32, #tpu.memory_space<vmem>>, %arg3: memref<2x128xi8, #tpu.memory_space<vmem>>, %arg4: memref<2x128xf32, #tpu.memory_space<vmem>>, %arg5: memref<1x2x4xf32, #tpu.memory_space<vmem>>, %arg6: memref<1x1x4xf32, #tpu.memory_space<vmem>>, %arg7: memref<1x1x4xf32, #tpu.memory_space<vmem>>, %arg8: memref<1x2x128xf32, #tpu.memory_space<vmem>>) attributes {dimension_semantics = [#tpu.dimension_semantics<parallel>, #tpu.dimension_semantics<arbitrary>], iteration_bounds = array<i64: 2, 1>, scalar_prefetch = 0 : i64, scratch_operands = 0 : i64, tpu.core_type = #tpu.core_type<tc>, window_params = [{transform_indices = @transform_0, window_bounds = array<i64: 2, 4, 128>}, {transform_indices = @transform_1, window_bounds = array<i64: 2, 128>}, {transform_indices = @transform_2, window_bounds = array<i64: 2, 128>}, {transform_indices = @transform_3, window_bounds = array<i64: 1, 2, 4>}, {transform_indices = @transform_4, window_bounds = array<i64: 1, 1, 4>}, {transform_indices = @transform_5, window_bounds = array<i64: 1, 1, 4>}, {transform_indices = @transform_6, window_bounds = array<i64: 1, 2, 128>}]} {
    %c0_i32 = arith.constant 0 : i32
    %0 = arith.cmpi eq, %arg1, %c0_i32 : i32
    %1 = arith.extui %0 : i1 to i32
    %c0_i32_0 = arith.constant 0 : i32
    %2 = arith.cmpi ne, %1, %c0_i32_0 : i32
    scf.if %2 {
      %cst_38 = arith.constant 0.000000e+00 : f32
      %58 = vector.broadcast %cst_38 : f32 to vector<1x2x4xf32>
      %c0_39 = arith.constant 0 : index
      %c0_40 = arith.constant 0 : index
      %c0_41 = arith.constant 0 : index
      %59 = vector.load %arg5[%c0_39, %c0_40, %c0_41] : memref<1x2x4xf32, #tpu.memory_space<vmem>>, vector<1x2x4xf32>
      tpu.vector_store %arg5[%c0_39, %c0_40, %c0_41], %58 {strides = array<i32>} : memref<1x2x4xf32, #tpu.memory_space<vmem>>, vector<1x2x4xf32>,
      %cst_42 = arith.constant 0.000000e+00 : f32
      %60 = vector.broadcast %cst_42 : f32 to vector<1x1x4xf32>
      %c0_43 = arith.constant 0 : index
      %c0_44 = arith.constant 0 : index
      %c0_45 = arith.constant 0 : index
      %61 = vector.load %arg6[%c0_43, %c0_44, %c0_45] : memref<1x1x4xf32, #tpu.memory_space<vmem>>, vector<1x1x4xf32>
      tpu.vector_store %arg6[%c0_43, %c0_44, %c0_45], %60 {strides = array<i32>} : memref<1x1x4xf32, #tpu.memory_space<vmem>>, vector<1x1x4xf32>,
      %cst_46 = arith.constant 0.000000e+00 : f32
      %62 = vector.broadcast %cst_46 : f32 to vector<1x1x4xf32>
      %c0_47 = arith.constant 0 : index
      %c0_48 = arith.constant 0 : index
      %c0_49 = arith.constant 0 : index
      %63 = vector.load %arg7[%c0_47, %c0_48, %c0_49] : memref<1x1x4xf32, #tpu.memory_space<vmem>>, vector<1x1x4xf32>
      tpu.vector_store %arg7[%c0_47, %c0_48, %c0_49], %62 {strides = array<i32>} : memref<1x1x4xf32, #tpu.memory_space<vmem>>, vector<1x1x4xf32>,
      %cst_50 = arith.constant 0.000000e+00 : f32
      %64 = vector.broadcast %cst_50 : f32 to vector<1x2x128xf32>
      %c0_51 = arith.constant 0 : index
      %c0_52 = arith.constant 0 : index
      %c0_53 = arith.constant 0 : index
      %65 = vector.load %arg8[%c0_51, %c0_52, %c0_53] : memref<1x2x128xf32, #tpu.memory_space<vmem>>, vector<1x2x128xf32>
      tpu.vector_store %arg8[%c0_51, %c0_52, %c0_53], %64 {strides = array<i32>} : memref<1x2x128xf32, #tpu.memory_space<vmem>>, vector<1x2x128xf32>,
    } else {
    }
    %c0 = arith.constant 0 : index
    %c0_1 = arith.constant 0 : index
    %c0_2 = arith.constant 0 : index
    %3 = vector.load %arg2[%c0, %c0_1, %c0_2] : memref<2x4x128xf32, #tpu.memory_space<vmem>>, vector<2x4x128xf32>
    %c0_3 = arith.constant 0 : index
    %c0_4 = arith.constant 0 : index
    %4 = vector.load %arg3[%c0_3, %c0_4] : memref<2x128xi8, #tpu.memory_space<vmem>>, vector<2x128xi8>
    %5 = arith.extsi %4 : vector<2x128xi8> to vector<2x128xi32>
    %c0_5 = arith.constant 0 : index
    %c0_6 = arith.constant 0 : index
    %6 = vector.load %arg4[%c0_5, %c0_6] : memref<2x128xf32, #tpu.memory_space<vmem>>, vector<2x128xf32>
    %cst = arith.constant dense<0xFF800000> : vector<2x128xf32>
    %7 = vector.multi_reduction <maximumf>, %3, %cst [1] : vector<2x4x128xf32> to vector<2x128xf32>
    %8 = vector.shape_cast %7 : vector<2x128xf32> to vector<2x1x128xf32>
    %9 = vector.broadcast %8 : vector<2x1x128xf32> to vector<2x4x128xf32>
    %10 = arith.subf %3, %9 : vector<2x4x128xf32>
    %11 = math.exp %10 : vector<2x4x128xf32>
    %cst_7 = arith.constant dense<0.000000e+00> : vector<2x128xf32>
    %12 = vector.multi_reduction <add>, %11, %cst_7 [1] : vector<2x4x128xf32> to vector<2x128xf32>
    %13 = vector.shape_cast %12 : vector<2x128xf32> to vector<2x1x128xf32>
    %14 = tpu.reciprocal %13 {approx = true} : vector<2x1x128xf32> -> vector<2x1x128xf32>
    %15 = arith.mulf %13, %14 : vector<2x1x128xf32>
    %cst_8 = arith.constant 2.000000e+00 : f32
    %16 = vector.broadcast %cst_8 : f32 to vector<2x1x128xf32>
    %17 = arith.subf %16, %15 : vector<2x1x128xf32>
    %18 = arith.mulf %14, %17 : vector<2x1x128xf32>
    %19 = tpu.iota {dimensions = array<i32: 1>} : vector<2x4x128xi32>
    %20 = vector.shape_cast %5 : vector<2x128xi32> to vector<2x1x128xi32>
    %21 = vector.broadcast %20 : vector<2x1x128xi32> to vector<2x4x128xi32>
    %22 = arith.cmpi eq, %21, %19 : vector<2x4x128xi32>
    %23 = arith.extui %22 : vector<2x4x128xi1> to vector<2x4x128xi32>
    %24 = arith.sitofp %23 : vector<2x4x128xi32> to vector<2x4x128xf32>
    %cst_9 = arith.constant dense<0xFF800000> : vector<4x128xf32>
    %25 = vector.multi_reduction <maximumf>, %24, %cst_9 [0] : vector<2x4x128xf32> to vector<4x128xf32>
    %26 = vector.broadcast %18 : vector<2x1x128xf32> to vector<2x4x128xf32>
    %27 = arith.mulf %11, %26 : vector<2x4x128xf32>
    %c0_10 = arith.constant 0 : index
    %c0_11 = arith.constant 0 : index
    %c0_12 = arith.constant 0 : index
    %28 = vector.load %arg5[%c0_10, %c0_11, %c0_12] : memref<1x2x4xf32, #tpu.memory_space<vmem>>, vector<1x2x4xf32>
    %cst_13 = arith.constant dense<0.000000e+00> : vector<2x4xf32>
    %29 = vector.multi_reduction <add>, %27, %cst_13 [2] : vector<2x4x128xf32> to vector<2x4xf32>
    %30 = vector.shape_cast %29 : vector<2x4xf32> to vector<1x2x4xf32>
    %31 = arith.addf %28, %30 : vector<1x2x4xf32>
    %c0_14 = arith.constant 0 : index
    %c0_15 = arith.constant 0 : index
    %c0_16 = arith.constant 0 : index
    %32 = vector.load %arg5[%c0_14, %c0_15, %c0_16] : memref<1x2x4xf32, #tpu.memory_space<vmem>>, vector<1x2x4xf32>
    tpu.vector_store %arg5[%c0_14, %c0_15, %c0_16], %31 {strides = array<i32>} : memref<1x2x4xf32, #tpu.memory_space<vmem>>, vector<1x2x4xf32>,
    %c0_17 = arith.constant 0 : index
    %c0_18 = arith.constant 0 : index
    %c0_19 = arith.constant 0 : index
    %33 = vector.load %arg6[%c0_17, %c0_18, %c0_19] : memref<1x1x4xf32, #tpu.memory_space<vmem>>, vector<1x1x4xf32>
    %34 = vector.extract_strided_slice %27 {offsets = [0, 0, 0], sizes = [1, 4, 128], strides = [1, 1, 1]} : vector<2x4x128xf32> to vector<1x4x128xf32>
    %35 = vector.shape_cast %25 : vector<4x128xf32> to vector<1x4x128xf32>
    %36 = arith.mulf %34, %35 : vector<1x4x128xf32>
    %cst_20 = arith.constant dense<0.000000e+00> : vector<1x4xf32>
    %37 = vector.multi_reduction <add>, %36, %cst_20 [2] : vector<1x4x128xf32> to vector<1x4xf32>
    %38 = vector.shape_cast %37 : vector<1x4xf32> to vector<1x1x4xf32>
    %39 = arith.addf %33, %38 : vector<1x1x4xf32>
    %c0_21 = arith.constant 0 : index
    %c0_22 = arith.constant 0 : index
    %c0_23 = arith.constant 0 : index
    %40 = vector.load %arg6[%c0_21, %c0_22, %c0_23] : memref<1x1x4xf32, #tpu.memory_space<vmem>>, vector<1x1x4xf32>
    tpu.vector_store %arg6[%c0_21, %c0_22, %c0_23], %39 {strides = array<i32>} : memref<1x1x4xf32, #tpu.memory_space<vmem>>, vector<1x1x4xf32>,
    %c0_24 = arith.constant 0 : index
    %c0_25 = arith.constant 0 : index
    %c0_26 = arith.constant 0 : index
    %41 = vector.load %arg7[%c0_24, %c0_25, %c0_26] : memref<1x1x4xf32, #tpu.memory_space<vmem>>, vector<1x1x4xf32>
    %42 = vector.shape_cast %25 : vector<4x128xf32> to vector<1x4x128xf32>
    %cst_27 = arith.constant dense<0.000000e+00> : vector<1x4xf32>
    %43 = vector.multi_reduction <add>, %42, %cst_27 [2] : vector<1x4x128xf32> to vector<1x4xf32>
    %44 = vector.shape_cast %43 : vector<1x4xf32> to vector<1x1x4xf32>
    %45 = arith.addf %41, %44 : vector<1x1x4xf32>
    %c0_28 = arith.constant 0 : index
    %c0_29 = arith.constant 0 : index
    %c0_30 = arith.constant 0 : index
    %46 = vector.load %arg7[%c0_28, %c0_29, %c0_30] : memref<1x1x4xf32, #tpu.memory_space<vmem>>, vector<1x1x4xf32>
    tpu.vector_store %arg7[%c0_28, %c0_29, %c0_30], %45 {strides = array<i32>} : memref<1x1x4xf32, #tpu.memory_space<vmem>>, vector<1x1x4xf32>,
    %47 = arith.mulf %3, %24 : vector<2x4x128xf32>
    %cst_31 = arith.constant dense<0.000000e+00> : vector<2x128xf32>
    %48 = vector.multi_reduction <add>, %47, %cst_31 [1] : vector<2x4x128xf32> to vector<2x128xf32>
    %49 = math.log %13 : vector<2x1x128xf32>
    %50 = arith.addf %49, %8 : vector<2x1x128xf32>
    %51 = vector.shape_cast %50 : vector<2x1x128xf32> to vector<2x128xf32>
    %52 = arith.subf %51, %48 : vector<2x128xf32>
    %c0_32 = arith.constant 0 : index
    %c0_33 = arith.constant 0 : index
    %c0_34 = arith.constant 0 : index
    %53 = vector.load %arg8[%c0_32, %c0_33, %c0_34] : memref<1x2x128xf32, #tpu.memory_space<vmem>>, vector<1x2x128xf32>
    %54 = arith.mulf %52, %6 : vector<2x128xf32>
    %55 = vector.shape_cast %54 : vector<2x128xf32> to vector<1x2x128xf32>
    %56 = arith.addf %53, %55 : vector<1x2x128xf32>
    %c0_35 = arith.constant 0 : index
    %c0_36 = arith.constant 0 : index
    %c0_37 = arith.constant 0 : index
    %57 = vector.load %arg8[%c0_35, %c0_36, %c0_37] : memref<1x2x128xf32, #tpu.memory_space<vmem>>, vector<1x2x128xf32>
    tpu.vector_store %arg8[%c0_35, %c0_36, %c0_37], %56 {strides = array<i32>} : memref<1x2x128xf32, #tpu.memory_space<vmem>>, vector<1x2x128xf32>,
    return
  }
  func.func @transform_0(%arg0: i32, %arg1: i32) -> (i32, i32, i32) {
    %c1_i32 = arith.constant 1 : i32
    %0 = arith.muli %arg0, %c1_i32 : i32
    %1 = arith.addi %0, %arg1 : i32
    %c0_i32 = arith.constant 0 : i32
    %c0_i32_0 = arith.constant 0 : i32
    %c0_i32_1 = arith.constant 0 : i32
    return %c0_i32, %c0_i32_0, %1 : i32, i32, i32
  }
  func.func @transform_1(%arg0: i32, %arg1: i32) -> (i32, i32) {
    %c1_i32 = arith.constant 1 : i32
    %0 = arith.muli %arg0, %c1_i32 : i32
    %1 = arith.addi %0, %arg1 : i32
    %c0_i32 = arith.constant 0 : i32
    %c0_i32_0 = arith.constant 0 : i32
    return %c0_i32, %1 : i32, i32
  }
  func.func @transform_2(%arg0: i32, %arg1: i32) -> (i32, i32) {
    %c1_i32 = arith.constant 1 : i32
    %0 = arith.muli %arg0, %c1_i32 : i32
    %1 = arith.addi %0, %arg1 : i32
    %c0_i32 = arith.constant 0 : i32
    %c0_i32_0 = arith.constant 0 : i32
    return %c0_i32, %1 : i32, i32
  }
  func.func @transform_3(%arg0: i32, %arg1: i32) -> (i32, i32, i32) {
    %c0_i32 = arith.constant 0 : i32
    %c0_i32_0 = arith.constant 0 : i32
    %c0_i32_1 = arith.constant 0 : i32
    return %arg0, %c0_i32, %c0_i32_0 : i32, i32, i32
  }
  func.func @transform_4(%arg0: i32, %arg1: i32) -> (i32, i32, i32) {
    %c0_i32 = arith.constant 0 : i32
    %c0_i32_0 = arith.constant 0 : i32
    %c0_i32_1 = arith.constant 0 : i32
    return %arg0, %c0_i32, %c0_i32_0 : i32, i32, i32
  }
  func.func @transform_5(%arg0: i32, %arg1: i32) -> (i32, i32, i32) {
    %c0_i32 = arith.constant 0 : i32
    %c0_i32_0 = arith.constant 0 : i32
    %c0_i32_1 = arith.constant 0 : i32
    return %arg0, %c0_i32, %c0_i32_0 : i32, i32, i32
  }
  func.func @transform_6(%arg0: i32, %arg1: i32) -> (i32, i32, i32) {
    %c0_i32 = arith.constant 0 : i32
    %c0_i32_0 = arith.constant 0 : i32
    %c0_i32_1 = arith.constant 0 : i32
    return %arg0, %c0_i32, %c0_i32_0 : i32, i32, i32
  }
}

</mosaic_0001>

<llo_original>
// kernel: tpu_custom_call.1
$region0: #{tpu_custom_call.1}
  #allocation0 [shape = 'u32[]', space=smem, size = 0x4, offset = 0x4, fixed_abs, tag = 'smem constant byte address 0x4 - core index']
  #allocation1 [shape = 'u32[144,128]{1,0:T(1,128)}', space=vmem, size = 0x12000, scoped, tag = 'internal scratch']
  %s0 = inlined_call_operand.hbm [shape: f32[2,4,256], index: 0, kind: input, shape index: {}]
  %s1 = inlined_call_operand.hbm [shape: s8[2,256], index: 1, kind: input, shape index: {}]
  %s2 = inlined_call_operand.hbm [shape: f32[2,256], index: 2, kind: input, shape index: {}]
  %s3 = inlined_call_operand.hbm [shape: f32[2,2,4], index: 3, kind: output, shape index: {0}]
  %s4 = inlined_call_operand.hbm [shape: f32[2,1,4], index: 4, kind: output, shape index: {1}]
  %s5 = inlined_call_operand.hbm [shape: f32[2,1,4], index: 5, kind: output, shape index: {2}]
  %s6 = inlined_call_operand.hbm [shape: f32[2,2,128], index: 6, kind: output, shape index: {3}]
  %7 = xla_tuple %s3, %s4, %s5, %s6
  %s8 = sld [smem:[#allocation0]]
  $region85: #{tpu_custom_call.1} parent=0
    _
  %s10 = ssub.s32 1, %s8
  %s11 = scalar_select 0, %s10, %s8
  $region1: #{tpu_custom_call.1} parent=0
    #allocation2 [shape = 'u8[8192]{0}', space=vmem, size = 0x2000, scoped, tag = 'input window, operand 0']
    #allocation3 [shape = 's32[2]{0}', space=sflag, size = 0x8, scoped, tag = 'scoped memory for tpu_custom_call.1']
    #allocation4 [shape = 's32[2]{0}', space=sflag, size = 0x8, scoped, tag = 'scoped memory for tpu_custom_call.1']
    #allocation5 [shape = 'u8[1024]{0}', space=vmem, size = 0x400, scoped, tag = 'input window, operand 1']
    #allocation6 [shape = 's32[2]{0}', space=sflag, size = 0x8, scoped, tag = 'scoped memory for tpu_custom_call.1']
    #allocation7 [shape = 'u8[2048]{0}', space=vmem, size = 0x800, scoped, tag = 'input window, operand 2']
    #allocation8 [shape = 'u8[2048]{0}', space=vmem, size = 0x800, scoped, tag = 'output window, operand 0']
    #allocation9 [shape = 'u8[1024]{0}', space=vmem, size = 0x400, scoped, tag = 'output window, operand 1']
    #allocation10 [shape = 's32[2]{0}', space=sflag, size = 0x8, scoped, tag = 'scoped memory for tpu_custom_call.1']
    #allocation11 [shape = 'u8[1024]{0}', space=vmem, size = 0x400, scoped, tag = 'output window, operand 2']
    #allocation12 [shape = 'u8[2048]{0}', space=vmem, size = 0x800, scoped, tag = 'output window, operand 3']
    #allocation13 [shape = 's32[2]{0}', space=sflag, size = 0x8, scoped, tag = 'scoped memory for tpu_custom_call.1']
    %12 = vsyncpa [#allocation3], 0
    %s13 = scalar_lea.sflag [#allocation3], 1
    %14 = vsyncpa %s13, 0
    %15 = vsyncpa [#allocation6], 0
    %s16 = scalar_lea.sflag [#allocation6], 1
    %17 = vsyncpa %s16, 0
    %18 = vsyncpa [#allocation4], 0
    %s19 = scalar_lea.sflag [#allocation4], 1
    %20 = vsyncpa %s19, 0
    %21 = vsyncpa [#allocation10], 0
    %s22 = scalar_lea.sflag [#allocation10], 1
    %23 = vsyncpa %s22, 0
    %24 = vsyncpa [#allocation13], 0
    %s25 = scalar_lea.sflag [#allocation13], 1
    %26 = vsyncpa %s25, 0
    loop: start=0, step=1, limit=4
    $region2: #{tpu_custom_call.1} parent=1 // loop_pre_header
      _
    $region3: #{tpu_custom_call.1} parent=1 // loop_header
      %s28 = sphi 0, %s32
      %p29 = scmp.ge.s32.totalorder %s28, 4
      %s35 = sphi 0, %s47
      %s36 = sphi 0, %s43
      %s37 = sphi 0, %s35
      %s38 = sphi 0, %s36
      %s39 = sphi 0, %s37
      %s40 = sphi 0, %s38
      %s52 = sphi 0, %s54
      %s55 = sphi 0, %s52
      %s56 = sphi 0, %s55
      %s72 = sphi 0, %s56
      %s80 = sphi 0, %s82
      %s83 = sphi 0, %s80
      %s84 = sphi 0, %s83
      %s100 = sphi 0, %s84
      %s108 = sphi 0, %s110
      %s111 = sphi 0, %s108
      %s112 = sphi 0, %s111
      %s128 = sphi 0, %s112
      %s134 = sphi 0, %s136
      %s137 = sphi 0, %s134
      %s138 = sphi 0, %s137
      %s154 = sphi 0, %s138
      %s160 = sphi 0, %s162
      %s163 = sphi 0, %s160
      %s164 = sphi 0, %s163
      %s180 = sphi 0, %s164
      %s186 = sphi 0, %s188
      %s189 = sphi 0, %s186
      %s190 = sphi 0, %s189
      %s206 = sphi 0, %s190
      %s212 = sphi 0, %s214
      %s215 = sphi 0, %s212
      %s216 = sphi 0, %s215
      %s232 = sphi 0, %s216
    $region4: #{tpu_custom_call.1} parent=1 // loop_header_branch
      %31 = sbr.rel (%p29) target = $region8
    $region5: #{tpu_custom_call.1} parent=1 // loop_body
      %s33 = ssub.s32 %s28, 1
      %s34 = ssub.s32 %s28, 2
      %s41 = sadd.s32 1, %s36
      %p42 = scmp.ge.s32.totalorder %s41, 1
      %s43 = scalar_select %p42, 0, %s41
      %s44 = sadd.s32 1, %s35
      %s45 = scalar_select %p42, %s44, %s35
      %p46 = scmp.ge.s32.totalorder %s45, 2
      %s47 = scalar_select %p46, 0, %s45
      %s48 = sadd.s32 %s35, %s36
      %s49 = sadd.s32 %s47, %s43
      %s50 = ssub.s32 %s48, %s49
      %p51 = scmp.eq.s32.totalorder %s50, 0
      %s53 = sadd.s32 %s52, 1
      %s54 = scalar_select %p51, %s52, %s53
      %p57 = pneg %p51
      %p58 = scmp.eq.s32.totalorder %s28, 1
      %p59 = por %p57, %p58
      %p60 = scmp.ne.s32.totalorder %s52, %s55
      %p61 = scmp.eq.s32.totalorder %s28, 0
      %p62 = por %p60, %p61
      %p63 = scmp.ne.s32.totalorder %s52, %s55
      %p64 = scmp.eq.s32.totalorder %s33, 1
      %p65 = por %p63, %p64
      %p66 = scmp.ne.s32.totalorder %s55, %s56
      %p67 = scmp.eq.s32.totalorder %s33, 0
      %p68 = por %p66, %p67
      %p69 = scmp.ne.s32.totalorder %s55, %s56
      %p70 = scmp.eq.s32.totalorder %s34, 1
      %p71 = por %p69, %p70
      %p73 = scmp.ne.s32.totalorder %s56, %s72
      %p74 = scmp.eq.s32.totalorder %s34, 0
      %p75 = por %p73, %p74
      %s76 = sadd.s32 %s35, %s36
      %s77 = sadd.s32 %s47, %s43
      %s78 = ssub.s32 %s76, %s77
      %p79 = scmp.eq.s32.totalorder %s78, 0
      %s81 = sadd.s32 %s80, 1
      %s82 = scalar_select %p79, %s80, %s81
      %p85 = pneg %p79
      %p86 = scmp.eq.s32.totalorder %s28, 1
      %p87 = por %p85, %p86
      %p88 = scmp.ne.s32.totalorder %s80, %s83
      %p89 = scmp.eq.s32.totalorder %s28, 0
      %p90 = por %p88, %p89
      %p91 = scmp.ne.s32.totalorder %s80, %s83
      %p92 = scmp.eq.s32.totalorder %s33, 1
      %p93 = por %p91, %p92
      %p94 = scmp.ne.s32.totalorder %s83, %s84
      %p95 = scmp.eq.s32.totalorder %s33, 0
      %p96 = por %p94, %p95
      %p97 = scmp.ne.s32.totalorder %s83, %s84
      %p98 = scmp.eq.s32.totalorder %s34, 1
      %p99 = por %p97, %p98
      %p101 = scmp.ne.s32.totalorder %s84, %s100
      %p102 = scmp.eq.s32.totalorder %s34, 0
      %p103 = por %p101, %p102
      %s104 = sadd.s32 %s35, %s36
      %s105 = sadd.s32 %s47, %s43
      %s106 = ssub.s32 %s104, %s105
      %p107 = scmp.eq.s32.totalorder %s106, 0
      %s109 = sadd.s32 %s108, 1
      %s110 = scalar_select %p107, %s108, %s109
      %p113 = pneg %p107
      %p114 = scmp.eq.s32.totalorder %s28, 1
      %p115 = por %p113, %p114
      %p116 = scmp.ne.s32.totalorder %s108, %s111
      %p117 = scmp.eq.s32.totalorder %s28, 0
      %p118 = por %p116, %p117
      %p119 = scmp.ne.s32.totalorder %s108, %s111
      %p120 = scmp.eq.s32.totalorder %s33, 1
      %p121 = por %p119, %p120
      %p122 = scmp.ne.s32.totalorder %s111, %s112
      %p123 = scmp.eq.s32.totalorder %s33, 0
      %p124 = por %p122, %p123
      %p125 = scmp.ne.s32.totalorder %s111, %s112
      %p126 = scmp.eq.s32.totalorder %s34, 1
      %p127 = por %p125, %p126
      %p129 = scmp.ne.s32.totalorder %s112, %s128
      %p130 = scmp.eq.s32.totalorder %s34, 0
      %p131 = por %p129, %p130
      %s132 = ssub.s32 %s35, %s47
      %p133 = scmp.eq.s32.totalorder %s132, 0
      %s135 = sadd.s32 %s134, 1
      %s136 = scalar_select %p133, %s134, %s135
      %p139 = pneg %p133
      %p140 = scmp.eq.s32.totalorder %s28, 1
      %p141 = por %p139, %p140
      %p142 = scmp.ne.s32.totalorder %s134, %s137
      %p143 = scmp.eq.s32.totalorder %s28, 0
      %p144 = por %p142, %p143
      %p145 = scmp.ne.s32.totalorder %s134, %s137
      %p146 = scmp.eq.s32.totalorder %s33, 1
      %p147 = por %p145, %p146
      %p148 = scmp.ne.s32.totalorder %s137, %s138
      %p149 = scmp.eq.s32.totalorder %s33, 0
      %p150 = por %p148, %p149
      %p151 = scmp.ne.s32.totalorder %s137, %s138
      %p152 = scmp.eq.s32.totalorder %s34, 1
      %p153 = por %p151, %p152
      %p155 = scmp.ne.s32.totalorder %s138, %s154
      %p156 = scmp.eq.s32.totalorder %s34, 0
      %p157 = por %p155, %p156
      %s158 = ssub.s32 %s35, %s47
      %p159 = scmp.eq.s32.totalorder %s158, 0
      %s161 = sadd.s32 %s160, 1
      %s162 = scalar_select %p159, %s160, %s161
      %p165 = pneg %p159
      %p166 = scmp.eq.s32.totalorder %s28, 1
      %p167 = por %p165, %p166
      %p168 = scmp.ne.s32.totalorder %s160, %s163
      %p169 = scmp.eq.s32.totalorder %s28, 0
      %p170 = por %p168, %p169
      %p171 = scmp.ne.s32.totalorder %s160, %s163
      %p172 = scmp.eq.s32.totalorder %s33, 1
      %p173 = por %p171, %p172
      %p174 = scmp.ne.s32.totalorder %s163, %s164
      %p175 = scmp.eq.s32.totalorder %s33, 0
      %p176 = por %p174, %p175
      %p177 = scmp.ne.s32.totalorder %s163, %s164
      %p178 = scmp.eq.s32.totalorder %s34, 1
      %p179 = por %p177, %p178
      %p181 = scmp.ne.s32.totalorder %s164, %s180
      %p182 = scmp.eq.s32.totalorder %s34, 0
      %p183 = por %p181, %p182
      %s184 = ssub.s32 %s35, %s47
      %p185 = scmp.eq.s32.totalorder %s184, 0
      %s187 = sadd.s32 %s186, 1
      %s188 = scalar_select %p185, %s186, %s187
      %p191 = pneg %p185
      %p192 = scmp.eq.s32.totalorder %s28, 1
      %p193 = por %p191, %p192
      %p194 = scmp.ne.s32.totalorder %s186, %s189
      %p195 = scmp.eq.s32.totalorder %s28, 0
      %p196 = por %p194, %p195
      %p197 = scmp.ne.s32.totalorder %s186, %s189
      %p198 = scmp.eq.s32.totalorder %s33, 1
      %p199 = por %p197, %p198
      %p200 = scmp.ne.s32.totalorder %s189, %s190
      %p201 = scmp.eq.s32.totalorder %s33, 0
      %p202 = por %p200, %p201
      %p203 = scmp.ne.s32.totalorder %s189, %s190
      %p204 = scmp.eq.s32.totalorder %s34, 1
      %p205 = por %p203, %p204
      %p207 = scmp.ne.s32.totalorder %s190, %s206
      %p208 = scmp.eq.s32.totalorder %s34, 0
      %p209 = por %p207, %p208
      %s210 = ssub.s32 %s35, %s47
      %p211 = scmp.eq.s32.totalorder %s210, 0
      %s213 = sadd.s32 %s212, 1
      %s214 = scalar_select %p211, %s212, %s213
      %p217 = pneg %p211
      %p218 = scmp.eq.s32.totalorder %s28, 1
      %p219 = por %p217, %p218
      %p220 = scmp.ne.s32.totalorder %s212, %s215
      %p221 = scmp.eq.s32.totalorder %s28, 0
      %p222 = por %p220, %p221
      %p223 = scmp.ne.s32.totalorder %s212, %s215
      %p224 = scmp.eq.s32.totalorder %s33, 1
      %p225 = por %p223, %p224
      %p226 = scmp.ne.s32.totalorder %s215, %s216
      %p227 = scmp.eq.s32.totalorder %s33, 0
      %p228 = por %p226, %p227
      %p229 = scmp.ne.s32.totalorder %s215, %s216
      %p230 = scmp.eq.s32.totalorder %s34, 1
      %p231 = por %p229, %p230
      %p233 = scmp.ne.s32.totalorder %s216, %s232
      %p234 = scmp.eq.s32.totalorder %s34, 0
      %p235 = por %p233, %p234
      %p236 = scmp.le.s32.totalorder 1, %s28
      %p237 = scmp.lt.s32.totalorder %s28, 3
      %p238 = pnand %p236, %p237
      %p239 = pneg %p238
      // Predicated region
      $region9: #{tpu_custom_call.1} parent=5 // pred_check
        _
      $region10: #{tpu_custom_call.1} parent=5 // pred_check_branch
        %241 = sbr.rel (%p238) target = $region12
      $region11: #{tpu_custom_call.1} parent=5 // pred_region
        %s242 = ssub.s32 %s28, 1
      $region12: #{tpu_custom_call.1} parent=5 // pred_fallthru
        _
      %p243 = scmp.lt.s32.totalorder %s28, 2
      // Predicated region
      $region13: #{tpu_custom_call.1} parent=5 // pred_check
        %p244 = pneg %p243
      $region14: #{tpu_custom_call.1} parent=5 // pred_check_branch
        %246 = sbr.rel (%p244) target = $region16
      $region15: #{tpu_custom_call.1} parent=5 // pred_region
        // Predicated region
        $region17: #{tpu_custom_call.1} parent=15 // pred_check
          %p247 = pneg %p62
        $region18: #{tpu_custom_call.1} parent=15 // pred_check_branch
          %249 = sbr.rel (%p247) target = $region20
        $region19: #{tpu_custom_call.1} parent=15 // pred_region
          %s250 = sand.u32 %s52, 1
          %s251 = scalar_lea.sflag [#allocation3], %s250
          %s252 = sand.u32 %s52, 1
          %s253 = smul.addr %s252, 8
          %s254 = scalar_lea.vmem [#allocation2], %s253
          %s255 = sadd.s32 %s35, %s36
          %s257 = ssub.s32 128, 128
          %258 = vsyncadd %s251, %s257
          %s259 = smul.addr %s255, 64
          %s260 = scalar_lea.hbm %s0, %s259
          %s261 = sshll.u32 %s254, 4
          %s262 = int_to_ptr.vmem [resolvable:$true] %s261
          %267 = dma.hbm_to_vmem [thread:$0]  %s260, 128, %s262, %s251, 128, 64, 4
        $region20: #{tpu_custom_call.1} parent=15 // pred_fallthru
          _
        // Predicated region
        $region21: #{tpu_custom_call.1} parent=15 // pred_check
          %p268 = pneg %p90
        $region22: #{tpu_custom_call.1} parent=15 // pred_check_branch
          %270 = sbr.rel (%p268) target = $region24
        $region23: #{tpu_custom_call.1} parent=15 // pred_region
          %s271 = sand.u32 %s28, 1
          %s272 = scalar_lea.sflag [#allocation6], %s271
          %s273 = sand.u32 %s80, 1
          %s274 = scalar_lea.vmem [#allocation5], %s273
          %s275 = sadd.s32 %s35, %s36
          %s277 = ssub.s32 16, 16
          %278 = vsyncadd %s272, %s277
          %s279 = smul.addr %s275, 16
          %s280 = scalar_lea.hbm %s1, %s279
          %s282 = sshll.u32 %s274, 4
          %s283 = int_to_ptr.vmem [resolvable:$true] %s282
          %285 = dma.hbm_to_vmem [thread:$0]  %s280, 16, %s283, %s272
        $region24: #{tpu_custom_call.1} parent=15 // pred_fallthru
          _
        // Predicated region
        $region25: #{tpu_custom_call.1} parent=15 // pred_check
          %p286 = pneg %p118
        $region26: #{tpu_custom_call.1} parent=15 // pred_check_branch
          %288 = sbr.rel (%p286) target = $region28
        $region27: #{tpu_custom_call.1} parent=15 // pred_region
          %s289 = sand.u32 %s28, 1
          %s290 = scalar_lea.sflag [#allocation6], %s289
          %s291 = sand.u32 %s108, 1
          %s292 = smul.addr %s291, 2
          %s293 = scalar_lea.vmem [#allocation7], %s292
          %s294 = sadd.s32 %s35, %s36
          %s296 = ssub.s32 32, 32
          %297 = vsyncadd %s290, %s296
          %s298 = smul.addr %s294, 32
          %s299 = scalar_lea.hbm %s2, %s298
          %s301 = sshll.u32 %s293, 4
          %s302 = int_to_ptr.vmem [resolvable:$true] %s301
          %304 = dma.hbm_to_vmem [thread:$0]  %s299, 32, %s302, %s290
        $region28: #{tpu_custom_call.1} parent=15 // pred_fallthru
          _
      $region16: #{tpu_custom_call.1} parent=5 // pred_fallthru
        _
      %p305 = scmp.le.s32.totalorder 1, %s28
      %p306 = scmp.lt.s32.totalorder %s28, 3
      %p307 = pnand %p305, %p306
      %p308 = pneg %p307
      // Predicated region
      $region29: #{tpu_custom_call.1} parent=5 // pred_check
        _
      $region30: #{tpu_custom_call.1} parent=5 // pred_check_branch
        %310 = sbr.rel (%p307) target = $region32
      $region31: #{tpu_custom_call.1} parent=5 // pred_region
        %s311 = ssub.s32 %s28, 1
        %s312 = sand.u32 %s55, 1
        %s313 = scalar_lea.sflag [#allocation3], %s312
        %s314 = sand.u32 %s55, 1
        %s315 = smul.addr %s314, 8
        %s316 = scalar_lea.vmem [#allocation2], %s315
        // Predicated region
        $region33: #{tpu_custom_call.1} parent=31 // pred_check
          %p317 = pneg %p68
        $region34: #{tpu_custom_call.1} parent=31 // pred_check_branch
          %319 = sbr.rel (%p317) target = $region36
        $region35: #{tpu_custom_call.1} parent=31 // pred_region
          %320 = dma.done %s313, 128
        $region36: #{tpu_custom_call.1} parent=31 // pred_fallthru
          _
        %s321 = sand.u32 %s33, 1
        %s322 = scalar_lea.sflag [#allocation6], %s321
        %s323 = sand.u32 %s83, 1
        %s324 = scalar_lea.vmem [#allocation5], %s323
        // Predicated region
        $region37: #{tpu_custom_call.1} parent=31 // pred_check
          %p325 = pneg %p96
        $region38: #{tpu_custom_call.1} parent=31 // pred_check_branch
          %327 = sbr.rel (%p325) target = $region40
        $region39: #{tpu_custom_call.1} parent=31 // pred_region
          %328 = dma.done %s322, 16
        $region40: #{tpu_custom_call.1} parent=31 // pred_fallthru
          _
        %s329 = sand.u32 %s33, 1
        %s330 = scalar_lea.sflag [#allocation6], %s329
        %s331 = sand.u32 %s111, 1
        %s332 = smul.addr %s331, 2
        %s333 = scalar_lea.vmem [#allocation7], %s332
        // Predicated region
        $region41: #{tpu_custom_call.1} parent=31 // pred_check
          %p334 = pneg %p124
        $region42: #{tpu_custom_call.1} parent=31 // pred_check_branch
          %336 = sbr.rel (%p334) target = $region44
        $region43: #{tpu_custom_call.1} parent=31 // pred_region
          %337 = dma.done %s330, 32
        $region44: #{tpu_custom_call.1} parent=31 // pred_fallthru
          _
        %s338 = sand.u32 %s55, 1
        %s339 = scalar_lea.sflag [#allocation3], %s338
        %s340 = sand.u32 %s55, 1
        %s341 = smul.addr %s340, 8
        %s342 = scalar_lea.vmem [#allocation2], %s341
        %p343 = pneg %p68
        %p344 = pneg %p65
        %s345 = sand.u32 %s33, 1
        %s346 = scalar_lea.sflag [#allocation6], %s345
        %s347 = sand.u32 %s83, 1
        %s348 = scalar_lea.vmem [#allocation5], %s347
        %p349 = pneg %p96
        %p350 = pneg %p93
        %s351 = sand.u32 %s33, 1
        %s352 = scalar_lea.sflag [#allocation6], %s351
        %s353 = sand.u32 %s111, 1
        %s354 = smul.addr %s353, 2
        %s355 = scalar_lea.vmem [#allocation7], %s354
        %p356 = pneg %p124
        %p357 = pneg %p121
        %p358 = pneg %p150
        %p359 = pneg %p147
        %s360 = sand.u32 %s137, 1
        %s361 = scalar_lea.sflag [#allocation4], %s360
        %s362 = sand.u32 %s137, 1
        %s363 = smul.addr %s362, 2
        %s364 = scalar_lea.vmem [#allocation8], %s363
        %p365 = pneg %p176
        %p366 = pneg %p173
        %s367 = sand.u32 %s33, 1
        %s368 = scalar_lea.sflag [#allocation10], %s367
        %s369 = sand.u32 %s163, 1
        %s370 = scalar_lea.vmem [#allocation9], %s369
        %p371 = pneg %p202
        %p372 = pneg %p199
        %s373 = sand.u32 %s33, 1
        %s374 = scalar_lea.sflag [#allocation10], %s373
        %s375 = sand.u32 %s189, 1
        %s376 = scalar_lea.vmem [#allocation11], %s375
        %p377 = pneg %p228
        %p378 = pneg %p225
        %s379 = sand.u32 %s215, 1
        %s380 = scalar_lea.sflag [#allocation13], %s379
        %s381 = sand.u32 %s215, 1
        %s382 = smul.addr %s381, 2
        %s383 = scalar_lea.vmem [#allocation12], %s382
        %s384 = sadd.s32 %s37, %s38
        %s385 = sadd.s32 %s37, %s38
        %s386 = sadd.s32 %s37, %s38
        %p387 = scmp.eq.s32.totalorder %s38, 0
        // Predicated region
        $region45: #{tpu_custom_call.1} parent=31 // pred_check
          %p388 = pneg %p387
        $region46: #{tpu_custom_call.1} parent=31 // pred_check_branch
          %390 = sbr.rel (%p388) target = $region48
        $region47: #{tpu_custom_call.1} parent=31 // pred_region
          %vm391 = vcmask 25600
          %392 = vst.msk [vmem:[%s364] sm:$0x3] %vm391, 0.0
          %vm393 = vcmask 24576
          %394 = vst.msk [vmem:[%s370] sm:$0x1] %vm393, 0.0
          %395 = vst.msk [vmem:[%s376] sm:$0x1] %vm393, 0.0
          %396 = vst [vmem:[%s383] sm:$0x3] 0.0
        $region48: #{tpu_custom_call.1} parent=31 // pred_fallthru
          _
        %v397 = vld [vmem:[%s316] sm:$0xf]
        %v398 = vld [vmem:[%s316 + $0x4] sm:$0xf]
        %v399 = vld [vmem:[%s324] sm:$0x1]
        %v400 = vunpack.c.0.s8 %v399
        %v401 = vld [vmem:[%s333] sm:$0x3]
        %vm402 = vcmask 1043456
        %v403 = vsel %vm402, %v397, -inf
        %v404 = vrot.slane %v403, 4
        %v405 = vmax.f32 %v403, %v404
        %v406 = vrot.slane %v405, 2
        %v407 = vmax.f32 %v405, %v406
        %v408 = vrot.slane %v407, 1
        %v409 = vmax.f32 %v407, %v408
        %v410 = vsel %vm402, %v398, -inf
        %v411 = vrot.slane %v410, 4
        %v412 = vmax.f32 %v410, %v411
        %v413 = vrot.slane %v412, 2
        %v414 = vmax.f32 %v412, %v413
        %v415 = vrot.slane %v414, 1
        %v416 = vmax.f32 %v414, %v415
        %v417 = vsub.f32 %v397, %v409
        %v418 = vsub.f32 %v398, %v416
        %v419 = vmul.f32 %v417, 1.442695
        %v420 = vpow.pop %v419
        %v421 = vmul.f32 %v418, 1.442695
        %v422 = vpow.pop %v421
        %v423 = vsel %vm402, %v420, 0.0
        %v424 = vrot.slane %v423, 4
        %v425 = vadd.f32 %v423, %v424
        %v426 = vrot.slane %v425, 2
        %v427 = vadd.f32 %v425, %v426
        %v428 = vrot.slane %v427, 1
        %v429 = vadd.f32 %v427, %v428
        %v430 = vsel %vm402, %v422, 0.0
        %v431 = vrot.slane %v430, 4
        %v432 = vadd.f32 %v430, %v431
        %v433 = vrot.slane %v432, 2
        %v434 = vadd.f32 %v432, %v433
        %v435 = vrot.slane %v434, 1
        %v436 = vadd.f32 %v434, %v435
        %v437 = vrcp.pop %v429
        %v438 = vrcp.pop %v436
        %v439 = vmul.f32 %v429, %v437
        %v440 = vmul.f32 %v436, %v438
        %v441 = vsub.f32 2.0, %v439
        %v442 = vsub.f32 2.0, %v440
        %v443 = vmul.f32 %v437, %v441
        %v444 = vmul.f32 %v438, %v442
        %v445 = vlaneseq
        %v446 = vshrl.u32 %v445, 7
        %v448 = vunpack.c.l.s4 1966171168
        %v449 = vunpack.c.0.s8 %v448
        %v450 = vlaneseq
        %v451 = vshrl.u32 %v450, 7
        %v452 = vsub.s32 %v449, %v451
        %v453 = vrot.slane %v400, %v452
        %v454 = vcombine.high %v453, %v453
        %v456 = vunpack.c.l.s4 1966171168
        %v457 = vunpack.c.0.s8 %v456
        %v458 = vlaneseq
        %v459 = vshrl.u32 %v458, 7
        %v460 = vsub.s32 %v457, %v459
        %v461 = vrot.slane %v453, %v460
        %v463 = vunpack.c.l.s4 1966171168
        %v464 = vunpack.c.0.s8 %v463
        %v465 = vlaneseq
        %v466 = vshrl.u32 %v465, 7
        %v467 = vsub.s32 %v464, %v466
        %v468 = vrot.slane %v454, %v467
        %v469 = vlaneseq
        %v470 = vshrl.u32 %v469, 7
        %v471 = vsub.s32 0, %v470
        %v472 = vrot.slane %v461, %v471
        %v473 = vlaneseq
        %v474 = vshrl.u32 %v473, 7
        %v475 = vsub.s32 0, %v474
        %v476 = vrot.slane %v468, %v475
        %vm477 = vcmp.eq.s32.totalorder %v472, %v446
        %vm478 = vcmp.eq.s32.totalorder %v476, %v446
        %v479 = vsel %vm477, 1, 0
        %v480 = vsel %vm478, 1, 0
        %v481 = vcvt.s32.f32 %v479
        %v482 = vcvt.s32.f32 %v480
        %v483 = vsel %vm402, %v481, -inf
        %v484 = vsel %vm402, %v482, -inf
        %v485 = vmax.f32 %v483, %v484
        %v486 = vmul.f32 %v420, %v443
        %v487 = vmul.f32 %v422, %v444
        %v488 = vld [vmem:[%s364] sm:$0x3]
        %v489 = vsel %vm402, %v486, 0.0
        %490 = vadd.xlane.f32.xlu0 %v489
        %v491 = vpop.xlane.xlu0 %490
        %v492 = vsel %vm402, %v487, 0.0
        %493 = vadd.xlane.f32.xlu0 %v492
        %v494 = vpop.xlane.xlu0 %493
        %v497 = vlaneseq
        %v498 = vand.u32 %v497, 127
        %v499 = vlaneseq
        %v500 = vshrl.u32 %v499, 7
        %v501 = vsub.s32 %v498, %v500
        %v502 = vrot.slane %v491, %v501
        %v503 = vlaneseq
        %v504 = vshrl.u32 %v503, 7
        %v505 = vsub.s32 %v498, %v504
        %v506 = vrot.slane %v494, %v505
        %vm507 = vcmask 1041409
        %v508 = vsel %vm507, %v506, %v502
        %v510 = vadd.f32 %v488, %v508
        %vm511 = vcmask 25600
        %512 = vst.msk [vmem:[%s364] sm:$0x3] %vm511, %v510
        %v513 = vld [vmem:[%s370] sm:$0x1]
        %v514 = vmul.f32 %v486, %v485
        %v515 = vsel %vm402, %v514, 0.0
        %516 = vadd.xlane.f32.xlu0 %v515
        %v517 = vpop.xlane.xlu0 %516
        %v519 = vlaneseq
        %v520 = vshrl.u32 %v519, 7
        %v521 = vsub.s32 0, %v520
        %v522 = vrot.slane %v517, %v521
        %v523 = vlaneseq
        %v524 = vshrl.u32 %v523, 7
        %v525 = vsub.s32 1, %v524
        %v526 = vrot.slane %v517, %v525
        %v527 = vlaneseq
        %v528 = vshrl.u32 %v527, 7
        %v529 = vsub.s32 2, %v528
        %v530 = vrot.slane %v517, %v529
        %v531 = vlaneseq
        %v532 = vshrl.u32 %v531, 7
        %v533 = vsub.s32 3, %v532
        %v534 = vrot.slane %v517, %v533
        %v535 = vcombine.low %v522, %v526
        %v536 = vcombine.low %v530, %v534
        %v538 = vunpack.c.l.s4 1966171168
        %v539 = vunpack.c.0.s8 %v538
        %v540 = vlaneseq
        %v541 = vshrl.u32 %v540, 7
        %v542 = vsub.s32 %v539, %v541
        %v543 = vrot.slane %v535, %v542
        %v545 = vunpack.c.l.s4 1966171168
        %v546 = vunpack.c.0.s8 %v545
        %v547 = vlaneseq
        %v548 = vshrl.u32 %v547, 7
        %v549 = vsub.s32 %v546, %v548
        %v550 = vrot.slane %v536, %v549
        %v551 = vcombine.low %v543, %v550
        %v553 = vunpack.c.l.s4 1966171168
        %v554 = vunpack.c.0.s8 %v553
        %v555 = vlaneseq
        %v556 = vshrl.u32 %v555, 7
        %v557 = vsub.s32 %v554, %v556
        %v558 = vrot.slane %v551, %v557
        %559 = vset.pattern.permute.xlu0 0
        %560 = vperm.xlu0 %559, %v558
        %v561 = vpop.permute.xlu0 %560
        %v562 = vlaneseq
        %v563 = vshrl.u32 %v562, 7
        %v564 = vsub.s32 %v498, %v563
        %v565 = vrot.slane %v561, %v564
        %v567 = vunpack.c.l.s4 1966171168
        %v568 = vunpack.c.0.s8 %v567
        %v569 = vlaneseq
        %v570 = vshrl.u32 %v569, 7
        %v571 = vsub.s32 %v568, %v570
        %v572 = vrot.slane %v565, %v571
        %v574 = vunpack.c.l.s4 1966171168
        %v575 = vunpack.c.0.s8 %v574
        %v576 = vlaneseq
        %v577 = vshrl.u32 %v576, 7
        %v578 = vsub.s32 %v575, %v577
        %v579 = vrot.slane %v572, %v578
        %v581 = vadd.f32 %v513, %v579
        %vm582 = vcmask 24576
        %583 = vst.msk [vmem:[%s370] sm:$0x1] %vm582, %v581
        %v584 = vld [vmem:[%s376] sm:$0x1]
        %v585 = vsel %vm402, %v485, 0.0
        %586 = vadd.xlane.f32.xlu0 %v585
        %v587 = vpop.xlane.xlu0 %586
        %v589 = vlaneseq
        %v590 = vshrl.u32 %v589, 7
        %v591 = vsub.s32 0, %v590
        %v592 = vrot.slane %v587, %v591
        %v593 = vlaneseq
        %v594 = vshrl.u32 %v593, 7
        %v595 = vsub.s32 1, %v594
        %v596 = vrot.slane %v587, %v595
        %v597 = vlaneseq
        %v598 = vshrl.u32 %v597, 7
        %v599 = vsub.s32 2, %v598
        %v600 = vrot.slane %v587, %v599
        %v601 = vlaneseq
        %v602 = vshrl.u32 %v601, 7
        %v603 = vsub.s32 3, %v602
        %v604 = vrot.slane %v587, %v603
        %v605 = vcombine.low %v592, %v596
        %v606 = vcombine.low %v600, %v604
        %v608 = vunpack.c.l.s4 1966171168
        %v609 = vunpack.c.0.s8 %v608
        %v610 = vlaneseq
        %v611 = vshrl.u32 %v610, 7
        %v612 = vsub.s32 %v609, %v611
        %v613 = vrot.slane %v605, %v612
        %v615 = vunpack.c.l.s4 1966171168
        %v616 = vunpack.c.0.s8 %v615
        %v617 = vlaneseq
        %v618 = vshrl.u32 %v617, 7
        %v619 = vsub.s32 %v616, %v618
        %v620 = vrot.slane %v606, %v619
        %v621 = vcombine.low %v613, %v620
        %v623 = vunpack.c.l.s4 1966171168
        %v624 = vunpack.c.0.s8 %v623
        %v625 = vlaneseq
        %v626 = vshrl.u32 %v625, 7
        %v627 = vsub.s32 %v624, %v626
        %v628 = vrot.slane %v621, %v627
        %629 = vset.pattern.permute.xlu0 0
        %630 = vperm.xlu0 %629, %v628
        %v631 = vpop.permute.xlu0 %630
        %v632 = vlaneseq
        %v633 = vshrl.u32 %v632, 7
        %v634 = vsub.s32 %v498, %v633
        %v635 = vrot.slane %v631, %v634
        %v637 = vunpack.c.l.s4 1966171168
        %v638 = vunpack.c.0.s8 %v637
        %v639 = vlaneseq
        %v640 = vshrl.u32 %v639, 7
        %v641 = vsub.s32 %v638, %v640
        %v642 = vrot.slane %v635, %v641
        %v644 = vunpack.c.l.s4 1966171168
        %v645 = vunpack.c.0.s8 %v644
        %v646 = vlaneseq
        %v647 = vshrl.u32 %v646, 7
        %v648 = vsub.s32 %v645, %v647
        %v649 = vrot.slane %v642, %v648
        %v651 = vadd.f32 %v584, %v649
        %652 = vst.msk [vmem:[%s376] sm:$0x1] %vm582, %v651
        %v653 = vmul.f32 %v397, %v481
        %v654 = vmul.f32 %v398, %v482
        %v655 = vsel %vm402, %v653, 0.0
        %v656 = vrot.slane %v655, 4
        %v657 = vadd.f32 %v655, %v656
        %v658 = vrot.slane %v657, 2
        %v659 = vadd.f32 %v657, %v658
        %v660 = vrot.slane %v659, 1
        %v661 = vadd.f32 %v659, %v660
        %v662 = vsel %vm402, %v654, 0.0
        %v663 = vrot.slane %v662, 4
        %v664 = vadd.f32 %v662, %v663
        %v665 = vrot.slane %v664, 2
        %v666 = vadd.f32 %v664, %v665
        %v667 = vrot.slane %v666, 1
        %v668 = vadd.f32 %v666, %v667
        %v669 = vlog2.pop %v429
        %v670 = vmul.f32 %v669, 0.6931472
        %v671 = vlog2.pop %v436
        %v672 = vmul.f32 %v671, 0.6931472
        %v673 = vadd.f32 %v670, %v409
        %v674 = vadd.f32 %v672, %v416
        %v675 = vsub.f32 %v673, %v661
        %v676 = vsub.f32 %v674, %v668
        %v677 = vld [vmem:[%s383] sm:$0x3]
        %v679 = vrot.slane %v401, 1
        %v682 = vmul.f32 %v675, %v401
        %v683 = vmul.f32 %v676, %v679
        %v686 = vrot.slane %v683, 7
        %v687 = vsel %vm507, %v686, %v682
        %v689 = vadd.f32 %v677, %v687
        %690 = vst [vmem:[%s383] sm:$0x3] %v689
        %s691 = sand.u32 %s137, 1
        %s692 = scalar_lea.sflag [#allocation4], %s691
        %s693 = sand.u32 %s137, 1
        %s694 = smul.addr %s693, 2
        %s695 = scalar_lea.vmem [#allocation8], %s694
        %s696 = sand.u32 %s33, 1
        %s697 = scalar_lea.sflag [#allocation10], %s696
        %s698 = sand.u32 %s163, 1
        %s699 = scalar_lea.vmem [#allocation9], %s698
        %s700 = sand.u32 %s33, 1
        %s701 = scalar_lea.sflag [#allocation10], %s700
        %s702 = sand.u32 %s189, 1
        %s703 = scalar_lea.vmem [#allocation11], %s702
        %s704 = sand.u32 %s215, 1
        %s705 = scalar_lea.sflag [#allocation13], %s704
        %s706 = sand.u32 %s215, 1
        %s707 = smul.addr %s706, 2
        %s708 = scalar_lea.vmem [#allocation12], %s707
        // Predicated region
        $region49: #{tpu_custom_call.1} parent=31 // pred_check
          %p709 = pneg %p147
        $region50: #{tpu_custom_call.1} parent=31 // pred_check_branch
          %711 = sbr.rel (%p709) target = $region52
        $region51: #{tpu_custom_call.1} parent=31 // pred_region
          %s713 = ssub.s32 32, 32
          %714 = vsyncadd %s692, %s713
          %s715 = smul.addr %s37, 32
          %s716 = scalar_lea.hbm %s3, %s715
          %s718 = sshll.u32 %s695, 4
          %s719 = int_to_ptr.vmem [resolvable:$true] %s718
          %721 = dma.vmem_to_hbm [thread:$0]  %s719, 32, %s716, %s692
        $region52: #{tpu_custom_call.1} parent=31 // pred_fallthru
          _
        // Predicated region
        $region53: #{tpu_custom_call.1} parent=31 // pred_check
          %p722 = pneg %p173
        $region54: #{tpu_custom_call.1} parent=31 // pred_check_branch
          %724 = sbr.rel (%p722) target = $region56
        $region55: #{tpu_custom_call.1} parent=31 // pred_region
          %s726 = ssub.s32 16, 16
          %727 = vsyncadd %s697, %s726
          %s728 = smul.addr %s37, 16
          %s729 = scalar_lea.hbm %s4, %s728
          %s731 = sshll.u32 %s699, 4
          %s732 = int_to_ptr.vmem [resolvable:$true] %s731
          %734 = dma.vmem_to_hbm [thread:$0]  %s732, 16, %s729, %s697
        $region56: #{tpu_custom_call.1} parent=31 // pred_fallthru
          _
        // Predicated region
        $region57: #{tpu_custom_call.1} parent=31 // pred_check
          %p735 = pneg %p199
        $region58: #{tpu_custom_call.1} parent=31 // pred_check_branch
          %737 = sbr.rel (%p735) target = $region60
        $region59: #{tpu_custom_call.1} parent=31 // pred_region
          %s739 = ssub.s32 16, 16
          %740 = vsyncadd %s701, %s739
          %s741 = smul.addr %s37, 16
          %s742 = scalar_lea.hbm %s5, %s741
          %s744 = sshll.u32 %s703, 4
          %s745 = int_to_ptr.vmem [resolvable:$true] %s744
          %747 = dma.vmem_to_hbm [thread:$0]  %s745, 16, %s742, %s701
        $region60: #{tpu_custom_call.1} parent=31 // pred_fallthru
          _
        // Predicated region
        $region61: #{tpu_custom_call.1} parent=31 // pred_check
          %p748 = pneg %p225
        $region62: #{tpu_custom_call.1} parent=31 // pred_check_branch
          %750 = sbr.rel (%p748) target = $region64
        $region63: #{tpu_custom_call.1} parent=31 // pred_region
          %s752 = ssub.s32 32, 32
          %753 = vsyncadd %s705, %s752
          %s754 = smul.addr %s37, 32
          %s755 = scalar_lea.hbm %s6, %s754
          %s757 = sshll.u32 %s708, 4
          %s758 = int_to_ptr.vmem [resolvable:$true] %s757
          %760 = dma.vmem_to_hbm [thread:$0]  %s758, 32, %s755, %s705
        $region64: #{tpu_custom_call.1} parent=31 // pred_fallthru
          _
      $region32: #{tpu_custom_call.1} parent=5 // pred_fallthru
        _
      %p761 = scmp.le.s32.totalorder 2, %s28
      // Predicated region
      $region65: #{tpu_custom_call.1} parent=5 // pred_check
        %p762 = pneg %p761
      $region66: #{tpu_custom_call.1} parent=5 // pred_check_branch
        %764 = sbr.rel (%p762) target = $region68
      $region67: #{tpu_custom_call.1} parent=5 // pred_region
        %s765 = ssub.s32 %s28, 2
        // Predicated region
        $region69: #{tpu_custom_call.1} parent=67 // pred_check
          %p766 = pneg %p153
        $region70: #{tpu_custom_call.1} parent=67 // pred_check_branch
          %768 = sbr.rel (%p766) target = $region72
        $region71: #{tpu_custom_call.1} parent=67 // pred_region
          %s769 = sand.u32 %s138, 1
          %s770 = scalar_lea.sflag [#allocation4], %s769
          %s771 = sand.u32 %s138, 1
          %s772 = smul.addr %s771, 2
          %s773 = scalar_lea.vmem [#allocation8], %s772
          %774 = dma.done %s770, 32
        $region72: #{tpu_custom_call.1} parent=67 // pred_fallthru
          _
        // Predicated region
        $region73: #{tpu_custom_call.1} parent=67 // pred_check
          %p775 = pneg %p179
        $region74: #{tpu_custom_call.1} parent=67 // pred_check_branch
          %777 = sbr.rel (%p775) target = $region76
        $region75: #{tpu_custom_call.1} parent=67 // pred_region
          %s778 = sand.u32 %s34, 1
          %s779 = scalar_lea.sflag [#allocation10], %s778
          %s780 = sand.u32 %s164, 1
          %s781 = scalar_lea.vmem [#allocation9], %s780
          %782 = dma.done %s779, 16
        $region76: #{tpu_custom_call.1} parent=67 // pred_fallthru
          _
        // Predicated region
        $region77: #{tpu_custom_call.1} parent=67 // pred_check
          %p783 = pneg %p205
        $region78: #{tpu_custom_call.1} parent=67 // pred_check_branch
          %785 = sbr.rel (%p783) target = $region80
        $region79: #{tpu_custom_call.1} parent=67 // pred_region
          %s786 = sand.u32 %s34, 1
          %s787 = scalar_lea.sflag [#allocation10], %s786
          %s788 = sand.u32 %s190, 1
          %s789 = scalar_lea.vmem [#allocation11], %s788
          %790 = dma.done %s787, 16
        $region80: #{tpu_custom_call.1} parent=67 // pred_fallthru
          _
        // Predicated region
        $region81: #{tpu_custom_call.1} parent=67 // pred_check
          %p791 = pneg %p231
        $region82: #{tpu_custom_call.1} parent=67 // pred_check_branch
          %793 = sbr.rel (%p791) target = $region84
        $region83: #{tpu_custom_call.1} parent=67 // pred_region
          %s794 = sand.u32 %s216, 1
          %s795 = scalar_lea.sflag [#allocation13], %s794
          %s796 = sand.u32 %s216, 1
          %s797 = smul.addr %s796, 2
          %s798 = scalar_lea.vmem [#allocation12], %s797
          %799 = dma.done %s795, 32
        $region84: #{tpu_custom_call.1} parent=67 // pred_fallthru
          _
      $region68: #{tpu_custom_call.1} parent=5 // pred_fallthru
        _
    $region6: #{tpu_custom_call.1} parent=1 // loop_footer
      %s32 = sadd.s32 1, %s28
    $region7: #{tpu_custom_call.1} parent=1 // loop_footer_branch
      %27 = sbr.rel target = $region3
    $region8: #{tpu_custom_call.1} parent=1 // loop_exit
      _
    %800 = vsyncpa [#allocation3], 1
    %s801 = scalar_lea.sflag [#allocation3], 1
    %802 = vsyncpa %s801, 1
    %803 = vsyncpa [#allocation6], 1
    %s804 = scalar_lea.sflag [#allocation6], 1
    %805 = vsyncpa %s804, 1
    %806 = vsyncpa [#allocation4], 1
    %s807 = scalar_lea.sflag [#allocation4], 1
    %808 = vsyncpa %s807, 1
    %809 = vsyncpa [#allocation10], 1
    %s810 = scalar_lea.sflag [#allocation10], 1
    %811 = vsyncpa %s810, 1
    %812 = vsyncpa [#allocation13], 1
    %s813 = scalar_lea.sflag [#allocation13], 1
    %814 = vsyncpa %s813, 1

</llo_original>
